<compile_context>
chip_gen: v5e
topology: v5e:2x2
jax: 0.10.0
libtpu: 0.0.40
codegen_flags: <defaults>
</compile_context>

<pallas_src>
import jax
import jax.numpy as jnp
from jax import lax
from jax.experimental import pallas as pl
from jax.experimental.pallas import tpu as pltpu

LANES = 128
SUBLANES = 8


def _dropout_kernel(seed_ref, thresh_ref, scale_ref, x_ref, o_ref):
    """Elementwise inverted dropout on one (row_tile, 128) block.

    seed_ref   : SMEM int32[1]   RNG seed
    thresh_ref : SMEM int32[1]   drop threshold = round(p_drop * 2^24)
    scale_ref  : SMEM f32[1]     1 / p_keep
    """
    block_rows = x_ref.shape[0]
    shape = (block_rows, LANES)

    # Global element index for this block (unique per element & grid step).
    row_ids = lax.broadcasted_iota(jnp.int32, shape, 0) + pl.program_id(0) * block_rows
    col_ids = lax.broadcasted_iota(jnp.int32, shape, 1)
    idx = (row_ids * LANES + col_ids).astype(jnp.uint32)

    # Counter-based hash -> uniform 32-bit value (murmur3 fmix32 finalizer).
    seed_u = seed_ref[0].astype(jnp.uint32)
    h = idx + seed_u * jnp.uint32(0x9E3779B9)
    h = h ^ (h >> 16)
    h = h * jnp.uint32(0x85EBCA6B)
    h = h ^ (h >> 13)
    h = h * jnp.uint32(0xC2B2AE35)
    h = h ^ (h >> 16)

    # 24-bit uniform, compared in signed int32 domain (safe, exact).
    bits24 = (h >> 8).astype(jnp.int32)
    keep = bits24 >= thresh_ref[0]          # keep <=> u >= p_drop

    x = x_ref[...]
    scale = scale_ref[0].astype(x.dtype)    # stay in native dtype (bf16-friendly)
    o_ref[...] = jnp.where(keep, x * scale, jnp.zeros_like(x))


def regular_dropout(x, logit, seed, *, tau=1.0, training=True):
    """Pallas implementation of RegularDropout.forward (parametric_noise=False).

    x:     float array of any shape (NCHW in the demo).
    logit: scalar float (the nn.Parameter, init -2.0).
    seed:  python int / int32 scalar.
    tau:   accepted for API parity; the hard (soft=False) forward sample is
           independent of tau for any tau > 0.
    """
    del tau  # mathematically irrelevant for the hard forward sample
    if not training:
        return x

    orig_shape = x.shape
    orig_dtype = x.dtype
    total = x.size

    # Flatten to a lane-dense (rows, 128) slab.  Pad only if needed (the
    # common case total % 128 == 0 avoids any extra HBM copies).
    padded = ((total + LANES - 1) // LANES) * LANES
    x_flat = jnp.reshape(x, (-1,))
    if padded != total:
        x_flat = jnp.pad(x_flat, (0, padded - total))
    rows = padded // LANES
    x2d = jnp.reshape(x_flat, (rows, LANES))

    # ~1 MiB f32 per block (2048 x 128 x 4B); with in+out double buffering
    # that is ~4 MiB of VMEM -> fits the scoped default on v5e/v6e/v7x.
    ROW_TILE = 2048
    row_tile = min(ROW_TILE, ((rows + SUBLANES - 1) // SUBLANES) * SUBLANES)
    grid = (pl.cdiv(rows, row_tile),)   # fixed tile; last block ragged/masked

    # Hoist all scalar math out of the kernel.
    logit_f32 = jnp.asarray(logit, jnp.float32)
    p_drop = jax.nn.sigmoid(logit_f32)
    p_keep = 1.0 - p_drop
    thresh = jnp.clip(jnp.round(p_drop * float(1 << 24)), 0.0, float(1 << 24))
    thresh_arr = thresh.astype(jnp.int32).reshape(1)
    scale_arr = (1.0 / p_keep).astype(jnp.float32).reshape(1)
    seed_arr = jnp.asarray([seed], dtype=jnp.int32)

    out2d = pl.pallas_call(
        _dropout_kernel,
        out_shape=jax.ShapeDtypeStruct((rows, LANES), orig_dtype),
        grid=grid,
        in_specs=[
            pl.BlockSpec(memory_space=pltpu.SMEM),              # seed
            pl.BlockSpec(memory_space=pltpu.SMEM),              # drop threshold
            pl.BlockSpec(memory_space=pltpu.SMEM),              # 1 / p_keep
            pl.BlockSpec((row_tile, LANES), lambda i: (i, 0)),  # x tile
        ],
        out_specs=pl.BlockSpec((row_tile, LANES), lambda i: (i, 0)),
        compiler_params=pltpu.CompilerParams(
            # Grid steps are independent -> shard across both TCs on v7x.
            dimension_semantics=("parallel",),
        ),
    )(seed_arr, thresh_arr, scale_arr, x2d)

    out_flat = jnp.reshape(out2d, (-1,))
    if padded != total:
        out_flat = out_flat[:total]
    return jnp.reshape(out_flat, orig_shape)


if __name__ == "__main__":
    key = jax.random.PRNGKey(0)
    # Small NCHW input consistent with a conv-style module: (B, C, H, W)
    x = jax.random.normal(key, (2, 4, 16, 16), dtype=jnp.float32)

    # Deterministic parameter init, matching the module's __init__.
    logit = jnp.float32(-2.0)

    out = regular_dropout(x, logit, seed=1234, tau=1.0, training=True)
    out = jax.block_until_ready(out)

    # Sanity 1: output is either 0 or x / p_keep elementwise.
    p_keep = 1.0 - jax.nn.sigmoid(logit)
    scaled = x / p_keep
    is_zero = jnp.isclose(out, 0.0)
    is_scaled = jnp.isclose(out, scaled, rtol=1e-5, atol=1e-5)
    assert bool(jnp.all(is_zero | is_scaled)), "dropout output mismatch"

    # Sanity 2: empirical keep rate is near p_keep (~0.881 for logit=-2).
    keep_frac = float(jnp.mean((out != 0.0).astype(jnp.float32)))
    assert 0.78 < keep_frac < 0.97, f"keep fraction off: {keep_frac}"

    # Sanity 3: eval mode is identity.
    out_eval = regular_dropout(x, logit, seed=1234, training=False)
    assert bool(jnp.allclose(out_eval, x))

    print("KERNEL_OK")
</pallas_src>

<mosaic_0001>
module attributes {stable_mosaic.version = 11 : i64} {
  func.func @_dropout_kernel(%arg0: i32, %arg1: memref<1xi32, #tpu.memory_space<smem>>, %arg2: memref<1xi32, #tpu.memory_space<smem>>, %arg3: memref<1xf32, #tpu.memory_space<smem>>, %arg4: memref<16x128xf32, #tpu.memory_space<vmem>>, %arg5: memref<16x128xf32, #tpu.memory_space<vmem>>) attributes {dimension_semantics = [#tpu.dimension_semantics<parallel>], iteration_bounds = array<i64: 1>, scalar_prefetch = 0 : i64, scratch_operands = 0 : i64, tpu.core_type = #tpu.core_type<tc>, window_params = [{transform_indices = @transform_0, window_bounds = array<i64: 1>}, {transform_indices = @transform_1, window_bounds = array<i64: 1>}, {transform_indices = @transform_2, window_bounds = array<i64: 1>}, {transform_indices = @transform_3, window_bounds = array<i64: 16, 128>}, {transform_indices = @transform_4, window_bounds = array<i64: 16, 128>}]} {
    %0 = tpu.iota {dimensions = array<i32: 0>} : vector<16x128xi32>
    %c16_i32 = arith.constant 16 : i32
    %1 = arith.muli %arg0, %c16_i32 : i32
    %2 = vector.broadcast %1 : i32 to vector<16x128xi32>
    %3 = arith.addi %0, %2 : vector<16x128xi32>
    %4 = tpu.iota {dimensions = array<i32: 1>} : vector<16x128xi32>
    %c128_i32 = arith.constant 128 : i32
    %5 = vector.broadcast %c128_i32 : i32 to vector<16x128xi32>
    %6 = arith.muli %3, %5 : vector<16x128xi32>
    %7 = arith.addi %6, %4 : vector<16x128xi32>
    %c0 = arith.constant 0 : index
    %8 = memref.load %arg1[%c0] : memref<1xi32, #tpu.memory_space<smem>>
    %c-1640531527_i32 = arith.constant -1640531527 : i32
    %9 = arith.muli %8, %c-1640531527_i32 : i32
    %10 = vector.broadcast %9 : i32 to vector<16x128xi32>
    %11 = arith.addi %7, %10 : vector<16x128xi32>
    %c16_i32_0 = arith.constant 16 : i32
    %12 = vector.broadcast %c16_i32_0 : i32 to vector<16x128xi32>
    %13 = arith.shrui %11, %12 : vector<16x128xi32>
    %14 = arith.xori %11, %13 : vector<16x128xi32>
    %c-2048144789_i32 = arith.constant -2048144789 : i32
    %15 = vector.broadcast %c-2048144789_i32 : i32 to vector<16x128xi32>
    %16 = arith.muli %14, %15 : vector<16x128xi32>
    %c13_i32 = arith.constant 13 : i32
    %17 = vector.broadcast %c13_i32 : i32 to vector<16x128xi32>
    %18 = arith.shrui %16, %17 : vector<16x128xi32>
    %19 = arith.xori %16, %18 : vector<16x128xi32>
    %c-1028477387_i32 = arith.constant -1028477387 : i32
    %20 = vector.broadcast %c-1028477387_i32 : i32 to vector<16x128xi32>
    %21 = arith.muli %19, %20 : vector<16x128xi32>
    %c16_i32_1 = arith.constant 16 : i32
    %22 = vector.broadcast %c16_i32_1 : i32 to vector<16x128xi32>
    %23 = arith.shrui %21, %22 : vector<16x128xi32>
    %24 = arith.xori %21, %23 : vector<16x128xi32>
    %c8_i32 = arith.constant 8 : i32
    %25 = vector.broadcast %c8_i32 : i32 to vector<16x128xi32>
    %26 = arith.shrui %24, %25 : vector<16x128xi32>
    %c0_2 = arith.constant 0 : index
    %27 = memref.load %arg2[%c0_2] : memref<1xi32, #tpu.memory_space<smem>>
    %28 = vector.broadcast %27 : i32 to vector<16x128xi32>
    %29 = arith.cmpi sge, %26, %28 : vector<16x128xi32>
    %c0_3 = arith.constant 0 : index
    %c0_4 = arith.constant 0 : index
    %30 = vector.load %arg4[%c0_3, %c0_4] : memref<16x128xf32, #tpu.memory_space<vmem>>, vector<16x128xf32>
    %c0_5 = arith.constant 0 : index
    %31 = memref.load %arg3[%c0_5] : memref<1xf32, #tpu.memory_space<smem>>
    %32 = vector.broadcast %31 : f32 to vector<16x128xf32>
    %33 = arith.mulf %30, %32 : vector<16x128xf32>
    %cst = arith.constant 0.000000e+00 : f32
    %34 = vector.broadcast %cst : f32 to vector<16x128xf32>
    %35 = arith.select %29, %33, %34 : vector<16x128xi1>, vector<16x128xf32>
    %c0_6 = arith.constant 0 : index
    %c0_7 = arith.constant 0 : index
    %36 = vector.load %arg5[%c0_6, %c0_7] : memref<16x128xf32, #tpu.memory_space<vmem>>, vector<16x128xf32>
    tpu.vector_store %arg5[%c0_6, %c0_7], %35 {strides = array<i32>} : memref<16x128xf32, #tpu.memory_space<vmem>>, vector<16x128xf32>,
    return
  }
  func.func @transform_0(%arg0: i32) -> i32 {
    %c0_i32 = arith.constant 0 : i32
    %c0_i32_0 = arith.constant 0 : i32
    return %c0_i32 : i32
  }
  func.func @transform_1(%arg0: i32) -> i32 {
    %c0_i32 = arith.constant 0 : i32
    %c0_i32_0 = arith.constant 0 : i32
    return %c0_i32 : i32
  }
  func.func @transform_2(%arg0: i32) -> i32 {
    %c0_i32 = arith.constant 0 : i32
    %c0_i32_0 = arith.constant 0 : i32
    return %c0_i32 : i32
  }
  func.func @transform_3(%arg0: i32) -> (i32, i32) {
    %c0_i32 = arith.constant 0 : i32
    %c0_i32_0 = arith.constant 0 : i32
    return %arg0, %c0_i32 : i32, i32
  }
  func.func @transform_4(%arg0: i32) -> (i32, i32) {
    %c0_i32 = arith.constant 0 : i32
    %c0_i32_0 = arith.constant 0 : i32
    return %arg0, %c0_i32 : i32, i32
  }
}

</mosaic_0001>

<llo_original>
// kernel: tpu_custom_call.1
$region0: #{tpu_custom_call.1}
  #allocation0 [shape = 'u32[]', space=smem, size = 0x4, offset = 0x4, fixed_abs, tag = 'smem constant byte address 0x4 - core index']
  #allocation1 [shape = 'u32[72,128]{1,0:T(1,128)}', space=vmem, size = 0x9000, scoped, tag = 'internal scratch']
  #allocation2 [shape = 's32[1]{0:T(128)S(6)}', space=smem, size = 0x200, scoped, tag = 'scoped memory for tpu_custom_call.1']
  #allocation3 [shape = 's32[1]{0:T(128)S(6)}', space=smem, size = 0x200, scoped, tag = 'scoped memory for tpu_custom_call.1']
  #allocation4 [shape = 'f32[1]{0:T(128)S(6)}', space=smem, size = 0x200, scoped, tag = 'scoped memory for tpu_custom_call.1']
  %s0 = inlined_call_operand.<no memory space> [shape: s32[1], index: 0, kind: input, shape index: {}]
  %s1 = inlined_call_operand.<no memory space> [shape: s32[1], index: 1, kind: input, shape index: {}]
  %s2 = inlined_call_operand.<no memory space> [shape: f32[1], index: 2, kind: input, shape index: {}]
  %s3 = inlined_call_operand.hbm [shape: f32[16,128], index: 3, kind: input, shape index: {}]
  %s4 = inlined_call_operand.hbm [shape: f32[16,128], index: 4, kind: output, shape index: {}]
  %s5 = sld [smem:[#allocation0]]
  $region30: #{tpu_custom_call.1} parent=0
    _
  %s7 = ssub.s32 1, %s5
  %s8 = scalar_select 0, %s7, %s5
  %9 = sst [smem:[#allocation2]] %s0
  %10 = sst [smem:[#allocation3]] %s1
  %11 = sst [smem:[#allocation4]] %s2
  $region1: #{tpu_custom_call.1} parent=0
    #allocation5 [shape = 'u8[8192]{0}', space=vmem, size = 0x2000, scoped, tag = 'input window, operand 3, single buffered']
    #allocation6 [shape = 's32[1]{0}', space=sflag, size = 0x4, scoped, tag = 'scoped memory for tpu_custom_call.1']
    #allocation7 [shape = 's32[1]{0}', space=sflag, size = 0x4, scoped, tag = 'scoped memory for tpu_custom_call.1']
    #allocation8 [shape = 'u8[8192]{0}', space=vmem, size = 0x2000, scoped, tag = 'output window, operand 0, single buffered']
    %12 = vsyncpa [#allocation6], 0
    %13 = vsyncpa [#allocation7], 0
    // Predicated region
    $region2: #{tpu_custom_call.1} parent=1 // pred_check
      _
    $region3: #{tpu_custom_call.1} parent=1 // pred_check_branch
      %15 = sbr.rel (0) target = $region5
    $region4: #{tpu_custom_call.1} parent=1 // pred_region
      _
    $region5: #{tpu_custom_call.1} parent=1 // pred_fallthru
      _
    // Predicated region
    $region6: #{tpu_custom_call.1} parent=1 // pred_check
      _
    $region7: #{tpu_custom_call.1} parent=1 // pred_check_branch
      %17 = sbr.rel (0) target = $region9
    $region8: #{tpu_custom_call.1} parent=1 // pred_region
      _
    $region9: #{tpu_custom_call.1} parent=1 // pred_fallthru
      _
    // Predicated region
    $region10: #{tpu_custom_call.1} parent=1 // pred_check
      _
    $region11: #{tpu_custom_call.1} parent=1 // pred_check_branch
      %19 = sbr.rel (0) target = $region13
    $region12: #{tpu_custom_call.1} parent=1 // pred_region
      _
    $region13: #{tpu_custom_call.1} parent=1 // pred_fallthru
      _
    // Predicated region
    $region14: #{tpu_custom_call.1} parent=1 // pred_check
      _
    $region15: #{tpu_custom_call.1} parent=1 // pred_check_branch
      %21 = sbr.rel (0) target = $region17
    $region16: #{tpu_custom_call.1} parent=1 // pred_region
      %23 = vsyncadd [#allocation6], 0
      %s24 = sshll.u32 %s3, 4
      %s25 = int_to_ptr.hbm [resolvable:$true] %s24
      %s26 = sshll.u32 [#allocation5], 4
      %s27 = int_to_ptr.vmem [resolvable:$true] %s26
      %32 = dma.hbm_to_vmem [thread:$0]  %s25, 256, %s27, [#allocation6], 128, 128, 8
    $region17: #{tpu_custom_call.1} parent=1 // pred_fallthru
      _
    // Predicated region
    $region18: #{tpu_custom_call.1} parent=1 // pred_check
      _
    $region19: #{tpu_custom_call.1} parent=1 // pred_check_branch
      %34 = sbr.rel (0) target = $region21
    $region20: #{tpu_custom_call.1} parent=1 // pred_region
      %36 = dma.done [#allocation6], 256
    $region21: #{tpu_custom_call.1} parent=1 // pred_fallthru
      _
    %v37 = vlaneseq
    %v38 = vshrl.u32 %v37, 7
    %v39 = vadd.s32 %v38, 8
    %s40 = smul.u32 0, 16
    %v41 = vstv %s40
    %v42 = vadd.s32 %v38, %v41
    %v43 = vadd.s32 %v39, %v41
    %v44 = vlaneseq
    %v45 = vand.u32 %v44, 127
    %v46 = vmul.u32 %v42, 128
    %v47 = vmul.u32 %v43, 128
    %v48 = vadd.s32 %v46, %v45
    %v49 = vadd.s32 %v47, %v45
    %s50 = sld [smem:[#allocation2]]
    %s51 = smul.u32 %s50, 2654435769
    %v52 = vstv %s51
    %v53 = vadd.s32 %v48, %v52
    %v54 = vadd.s32 %v49, %v52
    %v55 = vshrl.u32 %v53, 16
    %v56 = vshrl.u32 %v54, 16
    %v57 = vxor.u32 %v53, %v55
    %v58 = vxor.u32 %v54, %v56
    %v59 = vmul.u32 %v57, 2246822507
    %v60 = vmul.u32 %v58, 2246822507
    %v61 = vshrl.u32 %v59, 13
    %v62 = vshrl.u32 %v60, 13
    %v63 = vxor.u32 %v59, %v61
    %v64 = vxor.u32 %v60, %v62
    %v65 = vmul.u32 %v63, 3266489909
    %v66 = vmul.u32 %v64, 3266489909
    %v67 = vshrl.u32 %v65, 16
    %v68 = vshrl.u32 %v66, 16
    %v69 = vxor.u32 %v65, %v67
    %v70 = vxor.u32 %v66, %v68
    %v71 = vshrl.u32 %v69, 8
    %v72 = vshrl.u32 %v70, 8
    %s73 = sld [smem:[#allocation3]]
    %v74 = vstv %s73
    %vm75 = vcmp.ge.s32.totalorder %v71, %v74
    %vm76 = vcmp.ge.s32.totalorder %v72, %v74
    %v77 = vld [vmem:[#allocation5] sm:$0xff]
    %v78 = vld [vmem:[#allocation5 + $0x8] sm:$0xff]
    %s79 = sld [smem:[#allocation4]]
    %v80 = vstv %s79
    %v81 = vmul.f32 %v77, %v80
    %v82 = vmul.f32 %v78, %v80
    %v83 = vsel %vm75, %v81, 0.0
    %v84 = vsel %vm76, %v82, 0.0
    %85 = vst [vmem:[#allocation8] sm:$0xff] %v83
    %86 = vst [vmem:[#allocation8 + $0x8] sm:$0xff] %v84
    // Predicated region
    $region22: #{tpu_custom_call.1} parent=1 // pred_check
      _
    $region23: #{tpu_custom_call.1} parent=1 // pred_check_branch
      %88 = sbr.rel (0) target = $region25
    $region24: #{tpu_custom_call.1} parent=1 // pred_region
      %90 = vsyncadd [#allocation7], 0
      %s91 = sshll.u32 [#allocation8], 4
      %s92 = int_to_ptr.vmem [resolvable:$true] %s91
      %s93 = sshll.u32 %s4, 4
      %s94 = int_to_ptr.hbm [resolvable:$true] %s93
      %99 = dma.vmem_to_hbm [thread:$0]  %s92, 256, %s94, [#allocation7], 128, 128, 8
    $region25: #{tpu_custom_call.1} parent=1 // pred_fallthru
      _
    // Predicated region
    $region26: #{tpu_custom_call.1} parent=1 // pred_check
      _
    $region27: #{tpu_custom_call.1} parent=1 // pred_check_branch
      %101 = sbr.rel (0) target = $region29
    $region28: #{tpu_custom_call.1} parent=1 // pred_region
      %103 = dma.done [#allocation7], 256
    $region29: #{tpu_custom_call.1} parent=1 // pred_fallthru
      _
    %104 = vsyncpa [#allocation6], 1
    %105 = vsyncpa [#allocation7], 1

</llo_original>
